<compile_context>
chip_gen: v7x
topology: tpu7x:2x2x1
jax: 0.10.0
libtpu: 0.0.40
codegen_flags: <defaults>
</compile_context>

<pallas_src>
import jax
import jax.numpy as jnp
from jax.experimental import pallas as pl
from jax.experimental.pallas import tpu as pltpu


_W_LANES = 128   # lane-padded width of the [ones | x_map | y_map] weight slab


# -----------------------------------------------------------------------------
# Tiling helpers
# -----------------------------------------------------------------------------
def _round_up(x, m):
    return ((x + m - 1) // m) * m


def _vmem_capacity_bytes():
    # v5e/v6e: 128 MiB physical, v7x: 64 MiB.  Fall back to the smallest part
    # so the tiling stays conservative if the query is unavailable.
    try:
        return int(pltpu.get_tpu_info().vmem_capacity_bytes)
    except Exception:
        return 64 * 1024 * 1024


def _pick_tiling(nc, hw, itemsize):
    """Pick (tile_nc, scoped_vmem_bytes) for the current TPU generation."""
    cap = _vmem_capacity_bytes()
    # Scoped-VMEM budget requested from Mosaic: half the physical part,
    # capped at 48 MiB (v5e/v6e -> 48 MiB, v7x -> 32 MiB).
    scoped = min(cap // 2, 48 * 1024 * 1024)
    align = max(8, 32 // itemsize)          # sublane packing: 8 f32, 16 bf16

    # Explicit VMEM accounting: resident W slab once, then per tile row
    #   2 * hw * itemsize   double-buffered input tile
    # + 1 * hw * 4          the f32 exp temporary `e`
    # + 2 * 2 * 4           double-buffered (tile, 2) output
    # with 25% of the scoped budget left as headroom for Mosaic scratch.
    budget = (scoped * 3) // 4 - hw * _W_LANES * 4
    per_row = 2 * hw * itemsize + hw * 4 + 2 * 2 * 4
    rows_vmem = max(align, budget // per_row)

    # ~4 MiB of input tile per buffer amortizes the ~0.35us per-grid-step
    # overhead without a hard row cap (lets tile_nc grow when HW is small).
    rows_target = max(align, (4 * 1024 * 1024) // (hw * itemsize))

    tile = min(rows_vmem, rows_target)
    # Keep the grid at >= 4 steps when there are enough rows, so v7x's two
    # TensorCores each get a full double-buffer (no effect on v5e/v6e).
    if nc > 4 * align:
        tile = min(tile, _round_up(pl.cdiv(nc, 4), align))
    tile = max(align, (tile // align) * align)
    tile = min(tile, _round_up(nc, align))
    return tile, scoped


# -----------------------------------------------------------------------------
# Pallas kernel: fused softmax + expected-coordinate reduction (via MXU)
# -----------------------------------------------------------------------------
def _spatial_softmax_kernel(temp_ref, x_ref, w_ref, out_ref):
    # temp_ref: SMEM (1,) f32        -- softmax temperature (scalar prefetch)
    # x_ref   : VMEM (T, HW)         -- one row-tile of the flattened features
    # w_ref   : VMEM (HW, 128) f32   -- [ones | x_map | y_map | 0-pad], resident
    # out_ref : VMEM (T, 2)  f32     -- [expected_x, expected_y] per row
    inv_t = 1.0 / temp_ref[0]
    xv = x_ref[...]

    # Numerically-stable softmax with the temperature scale fused into the
    # exponent and DEFERRED normalization (divide the matmul sums instead of
    # normalizing the full tile).  Max-reduce runs on the native-dtype tile.
    m = jnp.max(xv, axis=-1, keepdims=True)
    e = jnp.exp((xv - m).astype(jnp.float32) * inv_t)                 # EUP

    # One MXU matmul replaces 3 lane-reductions + 2 broadcast multiplies:
    #   s[:, 0] = sum(e), s[:, 1] = sum(x_map*e), s[:, 2] = sum(y_map*e)
    s = jnp.dot(e, w_ref[...],
                preferred_element_type=jnp.float32,
                precision=jax.lax.Precision.HIGHEST)                  # (T, 128)

    inv_d = pl.reciprocal(s[:, 0:1], approx=False)
    out_ref[...] = s[:, 1:3] * inv_d


# -----------------------------------------------------------------------------
# Wrapper (mirrors SpatialSoftmax.forward)
# -----------------------------------------------------------------------------
def spatial_softmax(x, x_map, y_map, temperature):
    """x: (n, c, h, w) NCHW feature map. Returns (n, 2*c) expected keypoints."""
    n, c, h, w = x.shape
    nc, hw = n * c, h * w
    itemsize = jnp.dtype(x.dtype).itemsize

    tile_nc, scoped_vmem = _pick_tiling(nc, hw, itemsize)

    # x.contiguous().view(-1, h*w).  No padding copy of the feature map: a
    # ragged last row-block is clipped by Pallas (OOB reads are per-row-local
    # garbage, OOB/padded output rows are sliced off below).
    x2d = x.reshape(nc, hw)

    # Resident reduction weights: col 0 = ones (softmax denominator),
    # col 1 = x_map, col 2 = y_map, cols 3.. = zeros (lane padding).
    w_slab = jnp.zeros((hw, _W_LANES), jnp.float32)
    w_slab = w_slab.at[:, 0].set(1.0)
    w_slab = w_slab.at[:, 1].set(x_map.reshape(hw).astype(jnp.float32))
    w_slab = w_slab.at[:, 2].set(y_map.reshape(hw).astype(jnp.float32))

    temp = jnp.asarray(temperature, jnp.float32).reshape(1)

    nc_out = _round_up(nc, 8)          # tiny output-side pad only (fresh alloc)
    grid = (pl.cdiv(nc_out, tile_nc),)

    grid_spec = pltpu.PrefetchScalarGridSpec(
        num_scalar_prefetch=1,                 # temperature -> SMEM
        grid=grid,
        in_specs=[
            pl.BlockSpec((tile_nc, hw), lambda i, temp: (i, 0)),      # x tile
            pl.BlockSpec((hw, _W_LANES), lambda i, temp: (0, 0)),     # W (resident)
        ],
        out_specs=pl.BlockSpec((tile_nc, 2), lambda i, temp: (i, 0)),
    )

    cost = pl.CostEstimate(
        flops=2 * nc * hw * _W_LANES + 4 * nc * hw,
        transcendentals=nc * hw,
        bytes_accessed=nc * hw * itemsize + hw * _W_LANES * 4 + nc_out * 2 * 4,
    )

    out = pl.pallas_call(
        _spatial_softmax_kernel,
        out_shape=jax.ShapeDtypeStruct((nc_out, 2), jnp.float32),
        grid_spec=grid_spec,
        compiler_params=pltpu.CompilerParams(
            dimension_semantics=("parallel",),   # rows independent; v7x 2-TC shard
            vmem_limit_bytes=scoped_vmem,
        ),
        cost_estimate=cost,
    )(temp, x2d, w_slab)

    # torch.cat((expected_x, expected_y), 1).view(-1, c * 2)
    return out[:nc].reshape(n, c * 2)


# -----------------------------------------------------------------------------
# Parameter / buffer setup (mirrors SpatialSoftmax.__init__ exactly)
# -----------------------------------------------------------------------------
def make_coordinate_maps(num_rows, num_cols):
    # torch.meshgrid(linspace(-1,1,num_cols), linspace(-1,1,num_rows), indexing='ij')
    lin_cols = jnp.linspace(-1.0, 1.0, num_cols)
    lin_rows = jnp.linspace(-1.0, 1.0, num_rows)
    grid_x, grid_y = jnp.meshgrid(lin_cols, lin_rows, indexing="ij")
    x_map = grid_x.reshape(-1)   # length num_cols * num_rows == h * w
    y_map = grid_y.reshape(-1)
    return x_map, y_map


def _reference(x, x_map, y_map, temperature):
    n, c, h, w = x.shape
    x2d = x.reshape(-1, h * w).astype(jnp.float32)
    attn = jax.nn.softmax(x2d / temperature, axis=1)
    ex = jnp.sum(x_map[None, :] * attn, axis=1, keepdims=True)
    ey = jnp.sum(y_map[None, :] * attn, axis=1, keepdims=True)
    return jnp.concatenate([ex, ey], axis=1).reshape(n, c * 2)


if __name__ == "__main__":
    # Small shapes consistent with the module's forward.
    n, c, h, w = 2, 4, 16, 16
    num_rows, num_cols = h, w          # num_rows * num_cols must equal h * w
    temperature = 1.0                  # Parameter(torch.ones(1)) default

    key = jax.random.PRNGKey(0)
    x = jax.random.normal(key, (n, c, h, w), dtype=jnp.float32)

    x_map, y_map = make_coordinate_maps(num_rows, num_cols)

    out = spatial_softmax(x, x_map, y_map, temperature)
    out = jax.block_until_ready(out)

    ref = _reference(x, x_map, y_map, temperature)
    assert out.shape == (n, 2 * c), out.shape
    assert jnp.allclose(out, ref, atol=1e-5, rtol=1e-5), (
        float(jnp.max(jnp.abs(out - ref))))

    print("KERNEL_OK")
</pallas_src>

<mosaic_0001>
module attributes {stable_mosaic.version = 11 : i64} {
  func.func @_spatial_softmax_kernel(%arg0: i32, %arg1: memref<1xf32, #tpu.memory_space<smem>>, %arg2: memref<8x256xf32, #tpu.memory_space<vmem>>, %arg3: memref<256x128xf32, #tpu.memory_space<vmem>>, %arg4: memref<8x2xf32, #tpu.memory_space<vmem>>) attributes {dimension_semantics = [#tpu.dimension_semantics<parallel>], iteration_bounds = array<i64: 1>, scalar_prefetch = 1 : i64, scratch_operands = 0 : i64, tpu.core_type = #tpu.core_type<tc>, window_params = [{transform_indices = @transform_0, window_bounds = array<i64: 8, 256>}, {pipeline_mode = #tpu.pipeline_mode<synchronous>, transform_indices = @transform_1, window_bounds = array<i64: 256, 128>}, {transform_indices = @transform_2, window_bounds = array<i64: 8, 2>}]} {
    %c0 = arith.constant 0 : index
    %0 = memref.load %arg1[%c0] : memref<1xf32, #tpu.memory_space<smem>>
    %cst = arith.constant 1.000000e+00 : f32
    %1 = arith.divf %cst, %0 : f32
    %c0_0 = arith.constant 0 : index
    %c0_1 = arith.constant 0 : index
    %2 = vector.load %arg2[%c0_0, %c0_1] : memref<8x256xf32, #tpu.memory_space<vmem>>, vector<8x256xf32>
    %cst_2 = arith.constant dense<0xFF800000> : vector<8xf32>
    %3 = vector.multi_reduction <maximumf>, %2, %cst_2 [1] : vector<8x256xf32> to vector<8xf32>
    %4 = vector.shape_cast %3 : vector<8xf32> to vector<8x1xf32>
    %5 = vector.broadcast %4 : vector<8x1xf32> to vector<8x256xf32>
    %6 = arith.subf %2, %5 : vector<8x256xf32>
    %7 = vector.broadcast %1 : f32 to vector<8x256xf32>
    %8 = arith.mulf %6, %7 : vector<8x256xf32>
    %9 = math.exp %8 : vector<8x256xf32>
    %c0_3 = arith.constant 0 : index
    %c0_4 = arith.constant 0 : index
    %10 = vector.load %arg3[%c0_3, %c0_4] : memref<256x128xf32, #tpu.memory_space<vmem>>, vector<256x128xf32>
    %cst_5 = arith.constant dense<0.000000e+00> : vector<8x128xf32>
    %11 = tpu.matmul %9, %10, %cst_5 {dimension_numbers = #tpu.dot_dimension_numbers<[1], [0], [0], [1], [0, 0, 1, 1], [], []>, precision = #tpu.contract_precision<fp32>} : vector<8x256xf32>, vector<256x128xf32>, vector<8x128xf32> -> vector<8x128xf32>
    %12 = vector.extract_strided_slice %11 {offsets = [0, 0], sizes = [8, 1], strides = [1, 1]} : vector<8x128xf32> to vector<8x1xf32>
    %13 = tpu.reciprocal %12 : vector<8x1xf32> -> vector<8x1xf32>
    %14 = vector.extract_strided_slice %11 {offsets = [0, 1], sizes = [8, 2], strides = [1, 1]} : vector<8x128xf32> to vector<8x2xf32>
    %15 = vector.broadcast %13 : vector<8x1xf32> to vector<8x2xf32>
    %16 = arith.mulf %14, %15 : vector<8x2xf32>
    %c0_6 = arith.constant 0 : index
    %c0_7 = arith.constant 0 : index
    %17 = vector.load %arg4[%c0_6, %c0_7] : memref<8x2xf32, #tpu.memory_space<vmem>>, vector<8x2xf32>
    tpu.vector_store %arg4[%c0_6, %c0_7], %16 {strides = array<i32>} : memref<8x2xf32, #tpu.memory_space<vmem>>, vector<8x2xf32>,
    return
  }
  func.func @transform_0(%arg0: i32, %arg1: memref<1xf32, #tpu.memory_space<smem>>) -> (i32, i32) {
    %c0_i32 = arith.constant 0 : i32
    %c0_i32_0 = arith.constant 0 : i32
    return %arg0, %c0_i32 : i32, i32
  }
  func.func @transform_1(%arg0: i32, %arg1: memref<1xf32, #tpu.memory_space<smem>>) -> (i32, i32) {
    %c0_i32 = arith.constant 0 : i32
    %c0_i32_0 = arith.constant 0 : i32
    %c0_i32_1 = arith.constant 0 : i32
    return %c0_i32, %c0_i32_0 : i32, i32
  }
  func.func @transform_2(%arg0: i32, %arg1: memref<1xf32, #tpu.memory_space<smem>>) -> (i32, i32) {
    %c0_i32 = arith.constant 0 : i32
    %c0_i32_0 = arith.constant 0 : i32
    return %arg0, %c0_i32 : i32, i32
  }
}

</mosaic_0001>

<llo_original>
// kernel: tpu_custom_call.1
$region0: #{tpu_custom_call.1}
  #allocation0 [shape = 'u32[]', space=smem, size = 0x4, offset = 0x4, fixed_abs, tag = 'smem constant byte address 0x4 - core index']
  #allocation1 [shape = 'u32[144,128]{1,0:T(1,128)}', space=vmem, size = 0x12000, scoped, tag = 'internal scratch']
  #allocation2 [shape = 's32[1]{0}', space=sflag, size = 0x4, scoped, tag = 'scoped memory for tpu_custom_call.1']
  #allocation3 [shape = 'f32[1]{0:T(128)S(6)}', space=smem, size = 0x200, scoped, tag = 'prefetched SMEM operand 0']
  %s0 = inlined_call_operand.<no memory space> [shape: f32[1], index: 0, kind: input, shape index: {}]
  %s1 = inlined_call_operand.hbm [shape: f32[8,256], index: 1, kind: input, shape index: {}]
  %s2 = inlined_call_operand.hbm [shape: f32[256,128], index: 2, kind: input, shape index: {}]
  %s3 = inlined_call_operand.vmem [shape: f32[8,2], index: 3, kind: output, shape index: {}]
  %s4 = sld [smem:[#allocation0]]
  $region26: #{tpu_custom_call.1} parent=0
    _
  %s6 = ssub.s32 1, %s4
  %s7 = scalar_select 0, %s6, %s4
  %8 = sst [smem:[#allocation3]] %s0
  $region1: #{tpu_custom_call.1} parent=0
    #allocation4 [shape = 'u8[8192]{0}', space=vmem, size = 0x2000, scoped, tag = 'input window, operand 1, single buffered']
    #allocation5 [shape = 's32[1]{0}', space=sflag, size = 0x4, scoped, tag = 'scoped memory for tpu_custom_call.1']
    #allocation6 [shape = 'u8[131072]{0}', space=vmem, size = 0x20000, scoped, tag = 'input window, operand 2, single buffered']
    #allocation7 [shape = 's32[1]{0}', space=sflag, size = 0x4, scoped, tag = 'scoped memory for tpu_custom_call.1']
    %9 = vsyncpa [#allocation5], 0
    %10 = vsyncpa [#allocation7], 0
    // Predicated region
    $region2: #{tpu_custom_call.1} parent=1 // pred_check
      _
    $region3: #{tpu_custom_call.1} parent=1 // pred_check_branch
      %12 = sbr.rel (0) target = $region5
    $region4: #{tpu_custom_call.1} parent=1 // pred_region
      %s14 = ssub.s32 256, 256
      %15 = vsyncadd [#allocation5], %s14
      %s17 = sshll.u32 [#allocation4], 4
      %s18 = int_to_ptr.vmem [resolvable:$true] %s17
      %20 = dma.hbm_to_vmem [thread:$0]  %s1, 256, %s18, [#allocation5]
    $region5: #{tpu_custom_call.1} parent=1 // pred_fallthru
      _
    // Predicated region
    $region6: #{tpu_custom_call.1} parent=1 // pred_check
      _
    $region7: #{tpu_custom_call.1} parent=1 // pred_check_branch
      %22 = sbr.rel (0) target = $region9
    $region8: #{tpu_custom_call.1} parent=1 // pred_region
      %s24 = ssub.s32 4096, 4096
      %25 = vsyncadd [#allocation7], %s24
      %s26 = sshll.u32 [#allocation6], 4
      %s27 = int_to_ptr.vmem [resolvable:$true] %s26
      %32 = dma.hbm_to_vmem [thread:$0]  %s2, 4096, %s27, [#allocation7], 128, 128, 8
    $region9: #{tpu_custom_call.1} parent=1 // pred_fallthru
      _
    // Predicated region
    $region10: #{tpu_custom_call.1} parent=1 // pred_check
      _
    $region11: #{tpu_custom_call.1} parent=1 // pred_check_branch
      %34 = sbr.rel (0) target = $region13
    $region12: #{tpu_custom_call.1} parent=1 // pred_region
      %35 = dma.done [#allocation5], 256
    $region13: #{tpu_custom_call.1} parent=1 // pred_fallthru
      _
    // Predicated region
    $region14: #{tpu_custom_call.1} parent=1 // pred_check
      _
    $region15: #{tpu_custom_call.1} parent=1 // pred_check_branch
      %37 = sbr.rel (0) target = $region17
    $region16: #{tpu_custom_call.1} parent=1 // pred_region
      %38 = dma.done [#allocation7], 4096
    $region17: #{tpu_custom_call.1} parent=1 // pred_fallthru
      _
    %s39 = sld [smem:[#allocation3]]
    %v40 = vstv %s39
    %v41 = vrcp.pop %v40
    %s42 = vtos %v41
    %v43 = vld [vmem:[#allocation4] sm:$0xff]
    %v44 = vld [vmem:[#allocation4 + $0x8] sm:$0xff]
    %v45 = vmax.f32 %v43, %v44
    %46 = vmax.xlane.f32.xlu0 %v45
    %v47 = vpop.xlane.xlu0 %46
    %v48 = vsub.f32 %v43, %v47
    %v49 = vsub.f32 %v44, %v47
    %v50 = vstv %s42
    %v51 = vmul.f32 %v48, %v50
    %v52 = vmul.f32 %v49, %v50
    %v53 = vmul.f32 %v51, 1.442695
    %v54 = vpow.pop %v53
    %v55 = vmul.f32 %v52, 1.442695
    %v56 = vpow.pop %v55
    %v57 = vld [vmem:[#allocation6] sm:$0xff]
    %v58 = vld [vmem:[#allocation6 + $0x8] sm:$0xff]
    %v59 = vld [vmem:[#allocation6 + $0x10] sm:$0xff]
    %v60 = vld [vmem:[#allocation6 + $0x18] sm:$0xff]
    %v61 = vld [vmem:[#allocation6 + $0x20] sm:$0xff]
    %v62 = vld [vmem:[#allocation6 + $0x28] sm:$0xff]
    %v63 = vld [vmem:[#allocation6 + $0x30] sm:$0xff]
    %v64 = vld [vmem:[#allocation6 + $0x38] sm:$0xff]
    %v65 = vld [vmem:[#allocation6 + $0x40] sm:$0xff]
    %v66 = vld [vmem:[#allocation6 + $0x48] sm:$0xff]
    %v67 = vld [vmem:[#allocation6 + $0x50] sm:$0xff]
    %v68 = vld [vmem:[#allocation6 + $0x58] sm:$0xff]
    %v69 = vld [vmem:[#allocation6 + $0x60] sm:$0xff]
    %v70 = vld [vmem:[#allocation6 + $0x68] sm:$0xff]
    %v71 = vld [vmem:[#allocation6 + $0x70] sm:$0xff]
    %v72 = vld [vmem:[#allocation6 + $0x78] sm:$0xff]
    %v73 = vld [vmem:[#allocation6 + $0x80] sm:$0xff]
    %v74 = vld [vmem:[#allocation6 + $0x88] sm:$0xff]
    %v75 = vld [vmem:[#allocation6 + $0x90] sm:$0xff]
    %v76 = vld [vmem:[#allocation6 + $0x98] sm:$0xff]
    %v77 = vld [vmem:[#allocation6 + $0xa0] sm:$0xff]
    %v78 = vld [vmem:[#allocation6 + $0xa8] sm:$0xff]
    %v79 = vld [vmem:[#allocation6 + $0xb0] sm:$0xff]
    %v80 = vld [vmem:[#allocation6 + $0xb8] sm:$0xff]
    %v81 = vld [vmem:[#allocation6 + $0xc0] sm:$0xff]
    %v82 = vld [vmem:[#allocation6 + $0xc8] sm:$0xff]
    %v83 = vld [vmem:[#allocation6 + $0xd0] sm:$0xff]
    %v84 = vld [vmem:[#allocation6 + $0xd8] sm:$0xff]
    %v85 = vld [vmem:[#allocation6 + $0xe0] sm:$0xff]
    %v86 = vld [vmem:[#allocation6 + $0xe8] sm:$0xff]
    %v87 = vld [vmem:[#allocation6 + $0xf0] sm:$0xff]
    %v88 = vld [vmem:[#allocation6 + $0xf8] sm:$0xff]
    %89 = vmatprep.subr.mxu0 0.0
    %v90 = vand.u32 %v57, 4294901760
    %91 = vmatpush1.msra.mxu0 %v90
    %92 = vmatprep.subr.mxu0 0.0
    %v93 = vand.u32 %v58, 4294901760
    %94 = vmatpush1.msra.mxu0 %v93
    %95 = vmatprep.subr.mxu0 0.0
    %v96 = vand.u32 %v59, 4294901760
    %97 = vmatpush1.msra.mxu0 %v96
    %98 = vmatprep.subr.mxu0 0.0
    %v99 = vand.u32 %v60, 4294901760
    %100 = vmatpush1.msra.mxu0 %v99
    %101 = vmatprep.subr.mxu0 0.0
    %v102 = vand.u32 %v61, 4294901760
    %103 = vmatpush1.msra.mxu0 %v102
    %104 = vmatprep.subr.mxu0 0.0
    %v105 = vand.u32 %v62, 4294901760
    %106 = vmatpush1.msra.mxu0 %v105
    %107 = vmatprep.subr.mxu0 0.0
    %v108 = vand.u32 %v63, 4294901760
    %109 = vmatpush1.msra.mxu0 %v108
    %110 = vmatprep.subr.mxu0 0.0
    %v111 = vand.u32 %v64, 4294901760
    %112 = vmatpush1.msra.mxu0 %v111
    %113 = vmatprep.subr.mxu0 0.0
    %v114 = vand.u32 %v65, 4294901760
    %115 = vmatpush1.msra.mxu0 %v114
    %116 = vmatprep.subr.mxu0 0.0
    %v117 = vand.u32 %v66, 4294901760
    %118 = vmatpush1.msra.mxu0 %v117
    %119 = vmatprep.subr.mxu0 0.0
    %v120 = vand.u32 %v67, 4294901760
    %121 = vmatpush1.msra.mxu0 %v120
    %122 = vmatprep.subr.mxu0 0.0
    %v123 = vand.u32 %v68, 4294901760
    %124 = vmatpush1.msra.mxu0 %v123
    %125 = vmatprep.subr.mxu0 0.0
    %v126 = vand.u32 %v69, 4294901760
    %127 = vmatpush1.msra.mxu0 %v126
    %128 = vmatprep.subr.mxu0 0.0
    %v129 = vand.u32 %v70, 4294901760
    %130 = vmatpush1.msra.mxu0 %v129
    %131 = vmatprep.subr.mxu0 0.0
    %v132 = vand.u32 %v71, 4294901760
    %133 = vmatpush1.msra.mxu0 %v132
    %134 = vmatprep.subr.mxu0 0.0
    %v135 = vand.u32 %v72, 4294901760
    %136 = vmatpush1.msra.mxu0 %v135
    %137 = vmatprep.subr.mxu0 0.0
    %v138 = vand.u32 %v73, 4294901760
    %139 = vmatpush1.msra.mxu0 %v138
    %140 = vmatprep.subr.mxu0 0.0
    %v141 = vand.u32 %v74, 4294901760
    %142 = vmatpush1.msra.mxu0 %v141
    %143 = vmatprep.subr.mxu0 0.0
    %v144 = vand.u32 %v75, 4294901760
    %145 = vmatpush1.msra.mxu0 %v144
    %146 = vmatprep.subr.mxu0 0.0
    %v147 = vand.u32 %v76, 4294901760
    %148 = vmatpush1.msra.mxu0 %v147
    %149 = vmatprep.subr.mxu0 0.0
    %v150 = vand.u32 %v77, 4294901760
    %151 = vmatpush1.msra.mxu0 %v150
    %152 = vmatprep.subr.mxu0 0.0
    %v153 = vand.u32 %v78, 4294901760
    %154 = vmatpush1.msra.mxu0 %v153
    %155 = vmatprep.subr.mxu0 0.0
    %v156 = vand.u32 %v79, 4294901760
    %157 = vmatpush1.msra.mxu0 %v156
    %158 = vmatprep.subr.mxu0 0.0
    %v159 = vand.u32 %v80, 4294901760
    %160 = vmatpush1.msra.mxu0 %v159
    %161 = vmatprep.subr.mxu0 0.0
    %v162 = vand.u32 %v81, 4294901760
    %163 = vmatpush1.msra.mxu0 %v162
    %164 = vmatprep.subr.mxu0 0.0
    %v165 = vand.u32 %v82, 4294901760
    %166 = vmatpush1.msra.mxu0 %v165
    %167 = vmatprep.subr.mxu0 0.0
    %v168 = vand.u32 %v83, 4294901760
    %169 = vmatpush1.msra.mxu0 %v168
    %170 = vmatprep.subr.mxu0 0.0
    %v171 = vand.u32 %v84, 4294901760
    %172 = vmatpush1.msra.mxu0 %v171
    %173 = vmatprep.subr.mxu0 0.0
    %v174 = vand.u32 %v85, 4294901760
    %175 = vmatpush1.msra.mxu0 %v174
    %176 = vmatprep.subr.mxu0 0.0
    %v177 = vand.u32 %v86, 4294901760
    %178 = vmatpush1.msra.mxu0 %v177
    %179 = vmatprep.subr.mxu0 0.0
    %v180 = vand.u32 %v87, 4294901760
    %181 = vmatpush1.msra.mxu0 %v180
    %182 = vmatprep.subr.mxu0 0.0
    %v183 = vand.u32 %v88, 4294901760
    %184 = vmatpush1.msra.mxu0 %v183
    %v185 = vand.u32 %v56, 4294901760
    %v186 = vsub.f32 %v56, %v185
    %v187 = vand.u32 %v186, 4294901760
    %v188 = vsub.f32 %v186, %v187
    %v189 = vand.u32 %v188, 4294901760
    %190 = vmatprep.mubr.f32.mxu0 %v189
    %v191 = vand.u32 %v54, 4294901760
    %v192 = vsub.f32 %v54, %v191
    %v193 = vand.u32 %v192, 4294901760
    %v194 = vsub.f32 %v192, %v193
    %v195 = vand.u32 %v194, 4294901760
    %196 = vmatmul.mubr.f32.gmra.mrb[0].mxu0 %v195
    %v197 = vpop.f32.mrb[0].mxu0
    %v198 = vadd.f32 0.0, %v197
    %v199 = vpop.f32.mrb[0].mxu0
    %200 = vdwg.mxu0
    %201 = vmatprep.subr.mxu0 0.0
    %v202 = vand.u32 %v57, 4294901760
    %v203 = vsub.f32 %v57, %v202
    %v204 = vand.u32 %v203, 4294901760
    %v205 = vsub.f32 %v203, %v204
    %v206 = vand.u32 %v205, 4294901760
    %207 = vmatpush1.msra.mxu0 %v206
    %208 = vmatprep.subr.mxu0 0.0
    %v209 = vand.u32 %v58, 4294901760
    %v210 = vsub.f32 %v58, %v209
    %v211 = vand.u32 %v210, 4294901760
    %v212 = vsub.f32 %v210, %v211
    %v213 = vand.u32 %v212, 4294901760
    %214 = vmatpush1.msra.mxu0 %v213
    %215 = vmatprep.subr.mxu0 0.0
    %v216 = vand.u32 %v59, 4294901760
    %v217 = vsub.f32 %v59, %v216
    %v218 = vand.u32 %v217, 4294901760
    %v219 = vsub.f32 %v217, %v218
    %v220 = vand.u32 %v219, 4294901760
    %221 = vmatpush1.msra.mxu0 %v220
    %222 = vmatprep.subr.mxu0 0.0
    %v223 = vand.u32 %v60, 4294901760
    %v224 = vsub.f32 %v60, %v223
    %v225 = vand.u32 %v224, 4294901760
    %v226 = vsub.f32 %v224, %v225
    %v227 = vand.u32 %v226, 4294901760
    %228 = vmatpush1.msra.mxu0 %v227
    %229 = vmatprep.subr.mxu0 0.0
    %v230 = vand.u32 %v61, 4294901760
    %v231 = vsub.f32 %v61, %v230
    %v232 = vand.u32 %v231, 4294901760
    %v233 = vsub.f32 %v231, %v232
    %v234 = vand.u32 %v233, 4294901760
    %235 = vmatpush1.msra.mxu0 %v234
    %236 = vmatprep.subr.mxu0 0.0
    %v237 = vand.u32 %v62, 4294901760
    %v238 = vsub.f32 %v62, %v237
    %v239 = vand.u32 %v238, 4294901760
    %v240 = vsub.f32 %v238, %v239
    %v241 = vand.u32 %v240, 4294901760
    %242 = vmatpush1.msra.mxu0 %v241
    %243 = vmatprep.subr.mxu0 0.0
    %v244 = vand.u32 %v63, 4294901760
    %v245 = vsub.f32 %v63, %v244
    %v246 = vand.u32 %v245, 4294901760
    %v247 = vsub.f32 %v245, %v246
    %v248 = vand.u32 %v247, 4294901760
    %249 = vmatpush1.msra.mxu0 %v248
    %250 = vmatprep.subr.mxu0 0.0
    %v251 = vand.u32 %v64, 4294901760
    %v252 = vsub.f32 %v64, %v251
    %v253 = vand.u32 %v252, 4294901760
    %v254 = vsub.f32 %v252, %v253
    %v255 = vand.u32 %v254, 4294901760
    %256 = vmatpush1.msra.mxu0 %v255
    %257 = vmatprep.subr.mxu0 0.0
    %v258 = vand.u32 %v65, 4294901760
    %v259 = vsub.f32 %v65, %v258
    %v260 = vand.u32 %v259, 4294901760
    %v261 = vsub.f32 %v259, %v260
    %v262 = vand.u32 %v261, 4294901760
    %263 = vmatpush1.msra.mxu0 %v262
    %264 = vmatprep.subr.mxu0 0.0
    %v265 = vand.u32 %v66, 4294901760
    %v266 = vsub.f32 %v66, %v265
    %v267 = vand.u32 %v266, 4294901760
    %v268 = vsub.f32 %v266, %v267
    %v269 = vand.u32 %v268, 4294901760
    %270 = vmatpush1.msra.mxu0 %v269
    %271 = vmatprep.subr.mxu0 0.0
    %v272 = vand.u32 %v67, 4294901760
    %v273 = vsub.f32 %v67, %v272
    %v274 = vand.u32 %v273, 4294901760
    %v275 = vsub.f32 %v273, %v274
    %v276 = vand.u32 %v275, 4294901760
    %277 = vmatpush1.msra.mxu0 %v276
    %278 = vmatprep.subr.mxu0 0.0
    %v279 = vand.u32 %v68, 4294901760
    %v280 = vsub.f32 %v68, %v279
    %v281 = vand.u32 %v280, 4294901760
    %v282 = vsub.f32 %v280, %v281
    %v283 = vand.u32 %v282, 4294901760
    %284 = vmatpush1.msra.mxu0 %v283
    %285 = vmatprep.subr.mxu0 0.0
    %v286 = vand.u32 %v69, 4294901760
    %v287 = vsub.f32 %v69, %v286
    %v288 = vand.u32 %v287, 4294901760
    %v289 = vsub.f32 %v287, %v288
    %v290 = vand.u32 %v289, 4294901760
    %291 = vmatpush1.msra.mxu0 %v290
    %292 = vmatprep.subr.mxu0 0.0
    %v293 = vand.u32 %v70, 4294901760
    %v294 = vsub.f32 %v70, %v293
    %v295 = vand.u32 %v294, 4294901760
    %v296 = vsub.f32 %v294, %v295
    %v297 = vand.u32 %v296, 4294901760
    %298 = vmatpush1.msra.mxu0 %v297
    %299 = vmatprep.subr.mxu0 0.0
    %v300 = vand.u32 %v71, 4294901760
    %v301 = vsub.f32 %v71, %v300
    %v302 = vand.u32 %v301, 4294901760
    %v303 = vsub.f32 %v301, %v302
    %v304 = vand.u32 %v303, 4294901760
    %305 = vmatpush1.msra.mxu0 %v304
    %306 = vmatprep.subr.mxu0 0.0
    %v307 = vand.u32 %v72, 4294901760
    %v308 = vsub.f32 %v72, %v307
    %v309 = vand.u32 %v308, 4294901760
    %v310 = vsub.f32 %v308, %v309
    %v311 = vand.u32 %v310, 4294901760
    %312 = vmatpush1.msra.mxu0 %v311
    %313 = vmatprep.subr.mxu0 0.0
    %v314 = vand.u32 %v73, 4294901760
    %v315 = vsub.f32 %v73, %v314
    %v316 = vand.u32 %v315, 4294901760
    %v317 = vsub.f32 %v315, %v316
    %v318 = vand.u32 %v317, 4294901760
    %319 = vmatpush1.msra.mxu0 %v318
    %320 = vmatprep.subr.mxu0 0.0
    %v321 = vand.u32 %v74, 4294901760
    %v322 = vsub.f32 %v74, %v321
    %v323 = vand.u32 %v322, 4294901760
    %v324 = vsub.f32 %v322, %v323
    %v325 = vand.u32 %v324, 4294901760
    %326 = vmatpush1.msra.mxu0 %v325
    %327 = vmatprep.subr.mxu0 0.0
    %v328 = vand.u32 %v75, 4294901760
    %v329 = vsub.f32 %v75, %v328
    %v330 = vand.u32 %v329, 4294901760
    %v331 = vsub.f32 %v329, %v330
    %v332 = vand.u32 %v331, 4294901760
    %333 = vmatpush1.msra.mxu0 %v332
    %334 = vmatprep.subr.mxu0 0.0
    %v335 = vand.u32 %v76, 4294901760
    %v336 = vsub.f32 %v76, %v335
    %v337 = vand.u32 %v336, 4294901760
    %v338 = vsub.f32 %v336, %v337
    %v339 = vand.u32 %v338, 4294901760
    %340 = vmatpush1.msra.mxu0 %v339
    %341 = vmatprep.subr.mxu0 0.0
    %v342 = vand.u32 %v77, 4294901760
    %v343 = vsub.f32 %v77, %v342
    %v344 = vand.u32 %v343, 4294901760
    %v345 = vsub.f32 %v343, %v344
    %v346 = vand.u32 %v345, 4294901760
    %347 = vmatpush1.msra.mxu0 %v346
    %348 = vmatprep.subr.mxu0 0.0
    %v349 = vand.u32 %v78, 4294901760
    %v350 = vsub.f32 %v78, %v349
    %v351 = vand.u32 %v350, 4294901760
    %v352 = vsub.f32 %v350, %v351
    %v353 = vand.u32 %v352, 4294901760
    %354 = vmatpush1.msra.mxu0 %v353
    %355 = vmatprep.subr.mxu0 0.0
    %v356 = vand.u32 %v79, 4294901760
    %v357 = vsub.f32 %v79, %v356
    %v358 = vand.u32 %v357, 4294901760
    %v359 = vsub.f32 %v357, %v358
    %v360 = vand.u32 %v359, 4294901760
    %361 = vmatpush1.msra.mxu0 %v360
    %362 = vmatprep.subr.mxu0 0.0
    %v363 = vand.u32 %v80, 4294901760
    %v364 = vsub.f32 %v80, %v363
    %v365 = vand.u32 %v364, 4294901760
    %v366 = vsub.f32 %v364, %v365
    %v367 = vand.u32 %v366, 4294901760
    %368 = vmatpush1.msra.mxu0 %v367
    %369 = vmatprep.subr.mxu0 0.0
    %v370 = vand.u32 %v81, 4294901760
    %v371 = vsub.f32 %v81, %v370
    %v372 = vand.u32 %v371, 4294901760
    %v373 = vsub.f32 %v371, %v372
    %v374 = vand.u32 %v373, 4294901760
    %375 = vmatpush1.msra.mxu0 %v374
    %376 = vmatprep.subr.mxu0 0.0
    %v377 = vand.u32 %v82, 4294901760
    %v378 = vsub.f32 %v82, %v377
    %v379 = vand.u32 %v378, 4294901760
    %v380 = vsub.f32 %v378, %v379
    %v381 = vand.u32 %v380, 4294901760
    %382 = vmatpush1.msra.mxu0 %v381
    %383 = vmatprep.subr.mxu0 0.0
    %v384 = vand.u32 %v83, 4294901760
    %v385 = vsub.f32 %v83, %v384
    %v386 = vand.u32 %v385, 4294901760
    %v387 = vsub.f32 %v385, %v386
    %v388 = vand.u32 %v387, 4294901760
    %389 = vmatpush1.msra.mxu0 %v388
    %390 = vmatprep.subr.mxu0 0.0
    %v391 = vand.u32 %v84, 4294901760
    %v392 = vsub.f32 %v84, %v391
    %v393 = vand.u32 %v392, 4294901760
    %v394 = vsub.f32 %v392, %v393
    %v395 = vand.u32 %v394, 4294901760
    %396 = vmatpush1.msra.mxu0 %v395
    %397 = vmatprep.subr.mxu0 0.0
    %v398 = vand.u32 %v85, 4294901760
    %v399 = vsub.f32 %v85, %v398
    %v400 = vand.u32 %v399, 4294901760
    %v401 = vsub.f32 %v399, %v400
    %v402 = vand.u32 %v401, 4294901760
    %403 = vmatpush1.msra.mxu0 %v402
    %404 = vmatprep.subr.mxu0 0.0
    %v405 = vand.u32 %v86, 4294901760
    %v406 = vsub.f32 %v86, %v405
    %v407 = vand.u32 %v406, 4294901760
    %v408 = vsub.f32 %v406, %v407
    %v409 = vand.u32 %v408, 4294901760
    %410 = vmatpush1.msra.mxu0 %v409
    %411 = vmatprep.subr.mxu0 0.0
    %v412 = vand.u32 %v87, 4294901760
    %v413 = vsub.f32 %v87, %v412
    %v414 = vand.u32 %v413, 4294901760
    %v415 = vsub.f32 %v413, %v414
    %v416 = vand.u32 %v415, 4294901760
    %417 = vmatpush1.msra.mxu0 %v416
    %418 = vmatprep.subr.mxu0 0.0
    %v419 = vand.u32 %v88, 4294901760
    %v420 = vsub.f32 %v88, %v419
    %v421 = vand.u32 %v420, 4294901760
    %v422 = vsub.f32 %v420, %v421
    %v423 = vand.u32 %v422, 4294901760
    %424 = vmatpush1.msra.mxu0 %v423
    %v425 = vand.u32 %v56, 4294901760
    %426 = vmatprep.mubr.f32.mxu0 %v425
    %v427 = vand.u32 %v54, 4294901760
    %428 = vmatmul.mubr.f32.gmra.mrb[0].mxu0 %v427
    %v429 = vpop.f32.mrb[0].mxu0
    %v430 = vadd.f32 %v198, %v429
    %v431 = vpop.f32.mrb[0].mxu0
    %432 = vdwg.mxu0
    %433 = vmatprep.subr.mxu0 0.0
    %v434 = vand.u32 %v57, 4294901760
    %v435 = vsub.f32 %v57, %v434
    %436 = vmatpush1.msra.mxu0 %v435
    %437 = vmatprep.subr.mxu0 0.0
    %v438 = vand.u32 %v58, 4294901760
    %v439 = vsub.f32 %v58, %v438
    %440 = vmatpush1.msra.mxu0 %v439
    %441 = vmatprep.subr.mxu0 0.0
    %v442 = vand.u32 %v59, 4294901760
    %v443 = vsub.f32 %v59, %v442
    %444 = vmatpush1.msra.mxu0 %v443
    %445 = vmatprep.subr.mxu0 0.0
    %v446 = vand.u32 %v60, 4294901760
    %v447 = vsub.f32 %v60, %v446
    %448 = vmatpush1.msra.mxu0 %v447
    %449 = vmatprep.subr.mxu0 0.0
    %v450 = vand.u32 %v61, 4294901760
    %v451 = vsub.f32 %v61, %v450
    %452 = vmatpush1.msra.mxu0 %v451
    %453 = vmatprep.subr.mxu0 0.0
    %v454 = vand.u32 %v62, 4294901760
    %v455 = vsub.f32 %v62, %v454
    %456 = vmatpush1.msra.mxu0 %v455
    %457 = vmatprep.subr.mxu0 0.0
    %v458 = vand.u32 %v63, 4294901760
    %v459 = vsub.f32 %v63, %v458
    %460 = vmatpush1.msra.mxu0 %v459
    %461 = vmatprep.subr.mxu0 0.0
    %v462 = vand.u32 %v64, 4294901760
    %v463 = vsub.f32 %v64, %v462
    %464 = vmatpush1.msra.mxu0 %v463
    %465 = vmatprep.subr.mxu0 0.0
    %v466 = vand.u32 %v65, 4294901760
    %v467 = vsub.f32 %v65, %v466
    %468 = vmatpush1.msra.mxu0 %v467
    %469 = vmatprep.subr.mxu0 0.0
    %v470 = vand.u32 %v66, 4294901760
    %v471 = vsub.f32 %v66, %v470
    %472 = vmatpush1.msra.mxu0 %v471
    %473 = vmatprep.subr.mxu0 0.0
    %v474 = vand.u32 %v67, 4294901760
    %v475 = vsub.f32 %v67, %v474
    %476 = vmatpush1.msra.mxu0 %v475
    %477 = vmatprep.subr.mxu0 0.0
    %v478 = vand.u32 %v68, 4294901760
    %v479 = vsub.f32 %v68, %v478
    %480 = vmatpush1.msra.mxu0 %v479
    %481 = vmatprep.subr.mxu0 0.0
    %v482 = vand.u32 %v69, 4294901760
    %v483 = vsub.f32 %v69, %v482
    %484 = vmatpush1.msra.mxu0 %v483
    %485 = vmatprep.subr.mxu0 0.0
    %v486 = vand.u32 %v70, 4294901760
    %v487 = vsub.f32 %v70, %v486
    %488 = vmatpush1.msra.mxu0 %v487
    %489 = vmatprep.subr.mxu0 0.0
    %v490 = vand.u32 %v71, 4294901760
    %v491 = vsub.f32 %v71, %v490
    %492 = vmatpush1.msra.mxu0 %v491
    %493 = vmatprep.subr.mxu0 0.0
    %v494 = vand.u32 %v72, 4294901760
    %v495 = vsub.f32 %v72, %v494
    %496 = vmatpush1.msra.mxu0 %v495
    %497 = vmatprep.subr.mxu0 0.0
    %v498 = vand.u32 %v73, 4294901760
    %v499 = vsub.f32 %v73, %v498
    %500 = vmatpush1.msra.mxu0 %v499
    %501 = vmatprep.subr.mxu0 0.0
    %v502 = vand.u32 %v74, 4294901760
    %v503 = vsub.f32 %v74, %v502
    %504 = vmatpush1.msra.mxu0 %v503
    %505 = vmatprep.subr.mxu0 0.0
    %v506 = vand.u32 %v75, 4294901760
    %v507 = vsub.f32 %v75, %v506
    %508 = vmatpush1.msra.mxu0 %v507
    %509 = vmatprep.subr.mxu0 0.0
    %v510 = vand.u32 %v76, 4294901760
    %v511 = vsub.f32 %v76, %v510
    %512 = vmatpush1.msra.mxu0 %v511
    %513 = vmatprep.subr.mxu0 0.0
    %v514 = vand.u32 %v77, 4294901760
    %v515 = vsub.f32 %v77, %v514
    %516 = vmatpush1.msra.mxu0 %v515
    %517 = vmatprep.subr.mxu0 0.0
    %v518 = vand.u32 %v78, 4294901760
    %v519 = vsub.f32 %v78, %v518
    %520 = vmatpush1.msra.mxu0 %v519
    %521 = vmatprep.subr.mxu0 0.0
    %v522 = vand.u32 %v79, 4294901760
    %v523 = vsub.f32 %v79, %v522
    %524 = vmatpush1.msra.mxu0 %v523
    %525 = vmatprep.subr.mxu0 0.0
    %v526 = vand.u32 %v80, 4294901760
    %v527 = vsub.f32 %v80, %v526
    %528 = vmatpush1.msra.mxu0 %v527
    %529 = vmatprep.subr.mxu0 0.0
    %v530 = vand.u32 %v81, 4294901760
    %v531 = vsub.f32 %v81, %v530
    %532 = vmatpush1.msra.mxu0 %v531
    %533 = vmatprep.subr.mxu0 0.0
    %v534 = vand.u32 %v82, 4294901760
    %v535 = vsub.f32 %v82, %v534
    %536 = vmatpush1.msra.mxu0 %v535
    %537 = vmatprep.subr.mxu0 0.0
    %v538 = vand.u32 %v83, 4294901760
    %v539 = vsub.f32 %v83, %v538
    %540 = vmatpush1.msra.mxu0 %v539
    %541 = vmatprep.subr.mxu0 0.0
    %v542 = vand.u32 %v84, 4294901760
    %v543 = vsub.f32 %v84, %v542
    %544 = vmatpush1.msra.mxu0 %v543
    %545 = vmatprep.subr.mxu0 0.0
    %v546 = vand.u32 %v85, 4294901760
    %v547 = vsub.f32 %v85, %v546
    %548 = vmatpush1.msra.mxu0 %v547
    %549 = vmatprep.subr.mxu0 0.0
    %v550 = vand.u32 %v86, 4294901760
    %v551 = vsub.f32 %v86, %v550
    %552 = vmatpush1.msra.mxu0 %v551
    %553 = vmatprep.subr.mxu0 0.0
    %v554 = vand.u32 %v87, 4294901760
    %v555 = vsub.f32 %v87, %v554
    %556 = vmatpush1.msra.mxu0 %v555
    %557 = vmatprep.subr.mxu0 0.0
    %v558 = vand.u32 %v88, 4294901760
    %v559 = vsub.f32 %v88, %v558
    %560 = vmatpush1.msra.mxu0 %v559
    %v561 = vand.u32 %v56, 4294901760
    %v562 = vsub.f32 %v56, %v561
    %563 = vmatprep.mubr.f32.mxu0 %v562
    %v564 = vand.u32 %v54, 4294901760
    %v565 = vsub.f32 %v54, %v564
    %566 = vmatmul.mubr.f32.gmra.mrb[0].mxu0 %v565
    %v567 = vpop.f32.mrb[0].mxu0
    %v568 = vadd.f32 %v430, %v567
    %v569 = vpop.f32.mrb[0].mxu0
    %570 = vdwg.mxu0
    %571 = vmatprep.subr.mxu0 0.0
    %v572 = vand.u32 %v57, 4294901760
    %573 = vmatpush1.msra.mxu0 %v572
    %574 = vmatprep.subr.mxu0 0.0
    %v575 = vand.u32 %v58, 4294901760
    %576 = vmatpush1.msra.mxu0 %v575
    %577 = vmatprep.subr.mxu0 0.0
    %v578 = vand.u32 %v59, 4294901760
    %579 = vmatpush1.msra.mxu0 %v578
    %580 = vmatprep.subr.mxu0 0.0
    %v581 = vand.u32 %v60, 4294901760
    %582 = vmatpush1.msra.mxu0 %v581
    %583 = vmatprep.subr.mxu0 0.0
    %v584 = vand.u32 %v61, 4294901760
    %585 = vmatpush1.msra.mxu0 %v584
    %586 = vmatprep.subr.mxu0 0.0
    %v587 = vand.u32 %v62, 4294901760
    %588 = vmatpush1.msra.mxu0 %v587
    %589 = vmatprep.subr.mxu0 0.0
    %v590 = vand.u32 %v63, 4294901760
    %591 = vmatpush1.msra.mxu0 %v590
    %592 = vmatprep.subr.mxu0 0.0
    %v593 = vand.u32 %v64, 4294901760
    %594 = vmatpush1.msra.mxu0 %v593
    %595 = vmatprep.subr.mxu0 0.0
    %v596 = vand.u32 %v65, 4294901760
    %597 = vmatpush1.msra.mxu0 %v596
    %598 = vmatprep.subr.mxu0 0.0
    %v599 = vand.u32 %v66, 4294901760
    %600 = vmatpush1.msra.mxu0 %v599
    %601 = vmatprep.subr.mxu0 0.0
    %v602 = vand.u32 %v67, 4294901760
    %603 = vmatpush1.msra.mxu0 %v602
    %604 = vmatprep.subr.mxu0 0.0
    %v605 = vand.u32 %v68, 4294901760
    %606 = vmatpush1.msra.mxu0 %v605
    %607 = vmatprep.subr.mxu0 0.0
    %v608 = vand.u32 %v69, 4294901760
    %609 = vmatpush1.msra.mxu0 %v608
    %610 = vmatprep.subr.mxu0 0.0
    %v611 = vand.u32 %v70, 4294901760
    %612 = vmatpush1.msra.mxu0 %v611
    %613 = vmatprep.subr.mxu0 0.0
    %v614 = vand.u32 %v71, 4294901760
    %615 = vmatpush1.msra.mxu0 %v614
    %616 = vmatprep.subr.mxu0 0.0
    %v617 = vand.u32 %v72, 4294901760
    %618 = vmatpush1.msra.mxu0 %v617
    %619 = vmatprep.subr.mxu0 0.0
    %v620 = vand.u32 %v73, 4294901760
    %621 = vmatpush1.msra.mxu0 %v620
    %622 = vmatprep.subr.mxu0 0.0
    %v623 = vand.u32 %v74, 4294901760
    %624 = vmatpush1.msra.mxu0 %v623
    %625 = vmatprep.subr.mxu0 0.0
    %v626 = vand.u32 %v75, 4294901760
    %627 = vmatpush1.msra.mxu0 %v626
    %628 = vmatprep.subr.mxu0 0.0
    %v629 = vand.u32 %v76, 4294901760
    %630 = vmatpush1.msra.mxu0 %v629
    %631 = vmatprep.subr.mxu0 0.0
    %v632 = vand.u32 %v77, 4294901760
    %633 = vmatpush1.msra.mxu0 %v632
    %634 = vmatprep.subr.mxu0 0.0
    %v635 = vand.u32 %v78, 4294901760
    %636 = vmatpush1.msra.mxu0 %v635
    %637 = vmatprep.subr.mxu0 0.0
    %v638 = vand.u32 %v79, 4294901760
    %639 = vmatpush1.msra.mxu0 %v638
    %640 = vmatprep.subr.mxu0 0.0
    %v641 = vand.u32 %v80, 4294901760
    %642 = vmatpush1.msra.mxu0 %v641
    %643 = vmatprep.subr.mxu0 0.0
    %v644 = vand.u32 %v81, 4294901760
    %645 = vmatpush1.msra.mxu0 %v644
    %646 = vmatprep.subr.mxu0 0.0
    %v647 = vand.u32 %v82, 4294901760
    %648 = vmatpush1.msra.mxu0 %v647
    %649 = vmatprep.subr.mxu0 0.0
    %v650 = vand.u32 %v83, 4294901760
    %651 = vmatpush1.msra.mxu0 %v650
    %652 = vmatprep.subr.mxu0 0.0
    %v653 = vand.u32 %v84, 4294901760
    %654 = vmatpush1.msra.mxu0 %v653
    %655 = vmatprep.subr.mxu0 0.0
    %v656 = vand.u32 %v85, 4294901760
    %657 = vmatpush1.msra.mxu0 %v656
    %658 = vmatprep.subr.mxu0 0.0
    %v659 = vand.u32 %v86, 4294901760
    %660 = vmatpush1.msra.mxu0 %v659
    %661 = vmatprep.subr.mxu0 0.0
    %v662 = vand.u32 %v87, 4294901760
    %663 = vmatpush1.msra.mxu0 %v662
    %664 = vmatprep.subr.mxu0 0.0
    %v665 = vand.u32 %v88, 4294901760
    %666 = vmatpush1.msra.mxu0 %v665
    %v667 = vand.u32 %v56, 4294901760
    %v668 = vsub.f32 %v56, %v667
    %v669 = vand.u32 %v668, 4294901760
    %670 = vmatprep.mubr.f32.mxu0 %v669
    %v671 = vand.u32 %v54, 4294901760
    %v672 = vsub.f32 %v54, %v671
    %v673 = vand.u32 %v672, 4294901760
    %674 = vmatmul.mubr.f32.gmra.mrb[0].mxu0 %v673
    %v675 = vpop.f32.mrb[0].mxu0
    %v676 = vadd.f32 %v568, %v675
    %v677 = vpop.f32.mrb[0].mxu0
    %678 = vdwg.mxu0
    %679 = vmatprep.subr.mxu0 0.0
    %v680 = vand.u32 %v57, 4294901760
    %v681 = vsub.f32 %v57, %v680
    %v682 = vand.u32 %v681, 4294901760
    %683 = vmatpush1.msra.mxu0 %v682
    %684 = vmatprep.subr.mxu0 0.0
    %v685 = vand.u32 %v58, 4294901760
    %v686 = vsub.f32 %v58, %v685
    %v687 = vand.u32 %v686, 4294901760
    %688 = vmatpush1.msra.mxu0 %v687
    %689 = vmatprep.subr.mxu0 0.0
    %v690 = vand.u32 %v59, 4294901760
    %v691 = vsub.f32 %v59, %v690
    %v692 = vand.u32 %v691, 4294901760
    %693 = vmatpush1.msra.mxu0 %v692
    %694 = vmatprep.subr.mxu0 0.0
    %v695 = vand.u32 %v60, 4294901760
    %v696 = vsub.f32 %v60, %v695
    %v697 = vand.u32 %v696, 4294901760
    %698 = vmatpush1.msra.mxu0 %v697
    %699 = vmatprep.subr.mxu0 0.0
    %v700 = vand.u32 %v61, 4294901760
    %v701 = vsub.f32 %v61, %v700
    %v702 = vand.u32 %v701, 4294901760
    %703 = vmatpush1.msra.mxu0 %v702
    %704 = vmatprep.subr.mxu0 0.0
    %v705 = vand.u32 %v62, 4294901760
    %v706 = vsub.f32 %v62, %v705
    %v707 = vand.u32 %v706, 4294901760
    %708 = vmatpush1.msra.mxu0 %v707
    %709 = vmatprep.subr.mxu0 0.0
    %v710 = vand.u32 %v63, 4294901760
    %v711 = vsub.f32 %v63, %v710
    %v712 = vand.u32 %v711, 4294901760
    %713 = vmatpush1.msra.mxu0 %v712
    %714 = vmatprep.subr.mxu0 0.0
    %v715 = vand.u32 %v64, 4294901760
    %v716 = vsub.f32 %v64, %v715
    %v717 = vand.u32 %v716, 4294901760
    %718 = vmatpush1.msra.mxu0 %v717
    %719 = vmatprep.subr.mxu0 0.0
    %v720 = vand.u32 %v65, 4294901760
    %v721 = vsub.f32 %v65, %v720
    %v722 = vand.u32 %v721, 4294901760
    %723 = vmatpush1.msra.mxu0 %v722
    %724 = vmatprep.subr.mxu0 0.0
    %v725 = vand.u32 %v66, 4294901760
    %v726 = vsub.f32 %v66, %v725
    %v727 = vand.u32 %v726, 4294901760
    %728 = vmatpush1.msra.mxu0 %v727
    %729 = vmatprep.subr.mxu0 0.0
    %v730 = vand.u32 %v67, 4294901760
    %v731 = vsub.f32 %v67, %v730
    %v732 = vand.u32 %v731, 4294901760
    %733 = vmatpush1.msra.mxu0 %v732
    %734 = vmatprep.subr.mxu0 0.0
    %v735 = vand.u32 %v68, 4294901760
    %v736 = vsub.f32 %v68, %v735
    %v737 = vand.u32 %v736, 4294901760
    %738 = vmatpush1.msra.mxu0 %v737
    %739 = vmatprep.subr.mxu0 0.0
    %v740 = vand.u32 %v69, 4294901760
    %v741 = vsub.f32 %v69, %v740
    %v742 = vand.u32 %v741, 4294901760
    %743 = vmatpush1.msra.mxu0 %v742
    %744 = vmatprep.subr.mxu0 0.0
    %v745 = vand.u32 %v70, 4294901760
    %v746 = vsub.f32 %v70, %v745
    %v747 = vand.u32 %v746, 4294901760
    %748 = vmatpush1.msra.mxu0 %v747
    %749 = vmatprep.subr.mxu0 0.0
    %v750 = vand.u32 %v71, 4294901760
    %v751 = vsub.f32 %v71, %v750
    %v752 = vand.u32 %v751, 4294901760
    %753 = vmatpush1.msra.mxu0 %v752
    %754 = vmatprep.subr.mxu0 0.0
    %v755 = vand.u32 %v72, 4294901760
    %v756 = vsub.f32 %v72, %v755
    %v757 = vand.u32 %v756, 4294901760
    %758 = vmatpush1.msra.mxu0 %v757
    %759 = vmatprep.subr.mxu0 0.0
    %v760 = vand.u32 %v73, 4294901760
    %v761 = vsub.f32 %v73, %v760
    %v762 = vand.u32 %v761, 4294901760
    %763 = vmatpush1.msra.mxu0 %v762
    %764 = vmatprep.subr.mxu0 0.0
    %v765 = vand.u32 %v74, 4294901760
    %v766 = vsub.f32 %v74, %v765
    %v767 = vand.u32 %v766, 4294901760
    %768 = vmatpush1.msra.mxu0 %v767
    %769 = vmatprep.subr.mxu0 0.0
    %v770 = vand.u32 %v75, 4294901760
    %v771 = vsub.f32 %v75, %v770
    %v772 = vand.u32 %v771, 4294901760
    %773 = vmatpush1.msra.mxu0 %v772
    %774 = vmatprep.subr.mxu0 0.0
    %v775 = vand.u32 %v76, 4294901760
    %v776 = vsub.f32 %v76, %v775
    %v777 = vand.u32 %v776, 4294901760
    %778 = vmatpush1.msra.mxu0 %v777
    %779 = vmatprep.subr.mxu0 0.0
    %v780 = vand.u32 %v77, 4294901760
    %v781 = vsub.f32 %v77, %v780
    %v782 = vand.u32 %v781, 4294901760
    %783 = vmatpush1.msra.mxu0 %v782
    %784 = vmatprep.subr.mxu0 0.0
    %v785 = vand.u32 %v78, 4294901760
    %v786 = vsub.f32 %v78, %v785
    %v787 = vand.u32 %v786, 4294901760
    %788 = vmatpush1.msra.mxu0 %v787
    %789 = vmatprep.subr.mxu0 0.0
    %v790 = vand.u32 %v79, 4294901760
    %v791 = vsub.f32 %v79, %v790
    %v792 = vand.u32 %v791, 4294901760
    %793 = vmatpush1.msra.mxu0 %v792
    %794 = vmatprep.subr.mxu0 0.0
    %v795 = vand.u32 %v80, 4294901760
    %v796 = vsub.f32 %v80, %v795
    %v797 = vand.u32 %v796, 4294901760
    %798 = vmatpush1.msra.mxu0 %v797
    %799 = vmatprep.subr.mxu0 0.0
    %v800 = vand.u32 %v81, 4294901760
    %v801 = vsub.f32 %v81, %v800
    %v802 = vand.u32 %v801, 4294901760
    %803 = vmatpush1.msra.mxu0 %v802
    %804 = vmatprep.subr.mxu0 0.0
    %v805 = vand.u32 %v82, 4294901760
    %v806 = vsub.f32 %v82, %v805
    %v807 = vand.u32 %v806, 4294901760
    %808 = vmatpush1.msra.mxu0 %v807
    %809 = vmatprep.subr.mxu0 0.0
    %v810 = vand.u32 %v83, 4294901760
    %v811 = vsub.f32 %v83, %v810
    %v812 = vand.u32 %v811, 4294901760
    %813 = vmatpush1.msra.mxu0 %v812
    %814 = vmatprep.subr.mxu0 0.0
    %v815 = vand.u32 %v84, 4294901760
    %v816 = vsub.f32 %v84, %v815
    %v817 = vand.u32 %v816, 4294901760
    %818 = vmatpush1.msra.mxu0 %v817
    %819 = vmatprep.subr.mxu0 0.0
    %v820 = vand.u32 %v85, 4294901760
    %v821 = vsub.f32 %v85, %v820
    %v822 = vand.u32 %v821, 4294901760
    %823 = vmatpush1.msra.mxu0 %v822
    %824 = vmatprep.subr.mxu0 0.0
    %v825 = vand.u32 %v86, 4294901760
    %v826 = vsub.f32 %v86, %v825
    %v827 = vand.u32 %v826, 4294901760
    %828 = vmatpush1.msra.mxu0 %v827
    %829 = vmatprep.subr.mxu0 0.0
    %v830 = vand.u32 %v87, 4294901760
    %v831 = vsub.f32 %v87, %v830
    %v832 = vand.u32 %v831, 4294901760
    %833 = vmatpush1.msra.mxu0 %v832
    %834 = vmatprep.subr.mxu0 0.0
    %v835 = vand.u32 %v88, 4294901760
    %v836 = vsub.f32 %v88, %v835
    %v837 = vand.u32 %v836, 4294901760
    %838 = vmatpush1.msra.mxu0 %v837
    %v839 = vand.u32 %v56, 4294901760
    %840 = vmatprep.mubr.f32.mxu0 %v839
    %v841 = vand.u32 %v54, 4294901760
    %842 = vmatmul.mubr.f32.gmra.mrb[0].mxu0 %v841
    %v843 = vpop.f32.mrb[0].mxu0
    %v844 = vadd.f32 %v676, %v843
    %v845 = vpop.f32.mrb[0].mxu0
    %846 = vdwg.mxu0
    %847 = vmatprep.subr.mxu0 0.0
    %v848 = vand.u32 %v57, 4294901760
    %849 = vmatpush1.msra.mxu0 %v848
    %850 = vmatprep.subr.mxu0 0.0
    %v851 = vand.u32 %v58, 4294901760
    %852 = vmatpush1.msra.mxu0 %v851
    %853 = vmatprep.subr.mxu0 0.0
    %v854 = vand.u32 %v59, 4294901760
    %855 = vmatpush1.msra.mxu0 %v854
    %856 = vmatprep.subr.mxu0 0.0
    %v857 = vand.u32 %v60, 4294901760
    %858 = vmatpush1.msra.mxu0 %v857
    %859 = vmatprep.subr.mxu0 0.0
    %v860 = vand.u32 %v61, 4294901760
    %861 = vmatpush1.msra.mxu0 %v860
    %862 = vmatprep.subr.mxu0 0.0
    %v863 = vand.u32 %v62, 4294901760
    %864 = vmatpush1.msra.mxu0 %v863
    %865 = vmatprep.subr.mxu0 0.0
    %v866 = vand.u32 %v63, 4294901760
    %867 = vmatpush1.msra.mxu0 %v866
    %868 = vmatprep.subr.mxu0 0.0
    %v869 = vand.u32 %v64, 4294901760
    %870 = vmatpush1.msra.mxu0 %v869
    %871 = vmatprep.subr.mxu0 0.0
    %v872 = vand.u32 %v65, 4294901760
    %873 = vmatpush1.msra.mxu0 %v872
    %874 = vmatprep.subr.mxu0 0.0
    %v875 = vand.u32 %v66, 4294901760
    %876 = vmatpush1.msra.mxu0 %v875
    %877 = vmatprep.subr.mxu0 0.0
    %v878 = vand.u32 %v67, 4294901760
    %879 = vmatpush1.msra.mxu0 %v878
    %880 = vmatprep.subr.mxu0 0.0
    %v881 = vand.u32 %v68, 4294901760
    %882 = vmatpush1.msra.mxu0 %v881
    %883 = vmatprep.subr.mxu0 0.0
    %v884 = vand.u32 %v69, 4294901760
    %885 = vmatpush1.msra.mxu0 %v884
    %886 = vmatprep.subr.mxu0 0.0
    %v887 = vand.u32 %v70, 4294901760
    %888 = vmatpush1.msra.mxu0 %v887
    %889 = vmatprep.subr.mxu0 0.0
    %v890 = vand.u32 %v71, 4294901760
    %891 = vmatpush1.msra.mxu0 %v890
    %892 = vmatprep.subr.mxu0 0.0
    %v893 = vand.u32 %v72, 4294901760
    %894 = vmatpush1.msra.mxu0 %v893
    %895 = vmatprep.subr.mxu0 0.0
    %v896 = vand.u32 %v73, 4294901760
    %897 = vmatpush1.msra.mxu0 %v896
    %898 = vmatprep.subr.mxu0 0.0
    %v899 = vand.u32 %v74, 4294901760
    %900 = vmatpush1.msra.mxu0 %v899
    %901 = vmatprep.subr.mxu0 0.0
    %v902 = vand.u32 %v75, 4294901760
    %903 = vmatpush1.msra.mxu0 %v902
    %904 = vmatprep.subr.mxu0 0.0
    %v905 = vand.u32 %v76, 4294901760
    %906 = vmatpush1.msra.mxu0 %v905
    %907 = vmatprep.subr.mxu0 0.0
    %v908 = vand.u32 %v77, 4294901760
    %909 = vmatpush1.msra.mxu0 %v908
    %910 = vmatprep.subr.mxu0 0.0
    %v911 = vand.u32 %v78, 4294901760
    %912 = vmatpush1.msra.mxu0 %v911
    %913 = vmatprep.subr.mxu0 0.0
    %v914 = vand.u32 %v79, 4294901760
    %915 = vmatpush1.msra.mxu0 %v914
    %916 = vmatprep.subr.mxu0 0.0
    %v917 = vand.u32 %v80, 4294901760
    %918 = vmatpush1.msra.mxu0 %v917
    %919 = vmatprep.subr.mxu0 0.0
    %v920 = vand.u32 %v81, 4294901760
    %921 = vmatpush1.msra.mxu0 %v920
    %922 = vmatprep.subr.mxu0 0.0
    %v923 = vand.u32 %v82, 4294901760
    %924 = vmatpush1.msra.mxu0 %v923
    %925 = vmatprep.subr.mxu0 0.0
    %v926 = vand.u32 %v83, 4294901760
    %927 = vmatpush1.msra.mxu0 %v926
    %928 = vmatprep.subr.mxu0 0.0
    %v929 = vand.u32 %v84, 4294901760
    %930 = vmatpush1.msra.mxu0 %v929
    %931 = vmatprep.subr.mxu0 0.0
    %v932 = vand.u32 %v85, 4294901760
    %933 = vmatpush1.msra.mxu0 %v932
    %934 = vmatprep.subr.mxu0 0.0
    %v935 = vand.u32 %v86, 4294901760
    %936 = vmatpush1.msra.mxu0 %v935
    %937 = vmatprep.subr.mxu0 0.0
    %v938 = vand.u32 %v87, 4294901760
    %939 = vmatpush1.msra.mxu0 %v938
    %940 = vmatprep.subr.mxu0 0.0
    %v941 = vand.u32 %v88, 4294901760
    %942 = vmatpush1.msra.mxu0 %v941
    %v943 = vand.u32 %v56, 4294901760
    %944 = vmatprep.mubr.f32.mxu0 %v943
    %v945 = vand.u32 %v54, 4294901760
    %946 = vmatmul.mubr.f32.gmra.mrb[0].mxu0 %v945
    %v947 = vpop.f32.mrb[0].mxu0
    %v948 = vadd.f32 %v844, %v947
    %v949 = vpop.f32.mrb[0].mxu0
    %950 = vdwg.mxu0
    %v951 = vrcp.pop %v948
    %953 = vset.pattern.permute.xlu0 0
    %954 = vperm.xlu0 %953, %v951
    %v955 = vpop.permute.xlu0 %954
    %v957 = vmul.f32 %v948, %v955
    %959 = vrot.lane.b32.xlu0 %v957, 127
    %v960 = vpop.permute.xlu0 %959
    %vm962 = vcmask 15360
    %963 = vst.msk [vmem:[%s3] sm:$0xff] %vm962, %v960
    // Predicated region
    $region18: #{tpu_custom_call.1} parent=1 // pred_check
      _
    $region19: #{tpu_custom_call.1} parent=1 // pred_check_branch
      %965 = sbr.rel (0) target = $region21
    $region20: #{tpu_custom_call.1} parent=1 // pred_region
      _
    $region21: #{tpu_custom_call.1} parent=1 // pred_fallthru
      _
    // Predicated region
    $region22: #{tpu_custom_call.1} parent=1 // pred_check
      _
    $region23: #{tpu_custom_call.1} parent=1 // pred_check_branch
      %967 = sbr.rel (0) target = $region25
    $region24: #{tpu_custom_call.1} parent=1 // pred_region
      _
    $region25: #{tpu_custom_call.1} parent=1 // pred_fallthru
      _
    %968 = vsyncpa [#allocation5], 1
    %969 = vsyncpa [#allocation7], 1

</llo_original>
